<compile_context>
chip_gen: v7x
topology: tpu7x:2x2x1
jax: 0.10.0
libtpu: 0.0.40
codegen_flags: <defaults>
</compile_context>

<pallas_src>
import jax
import jax.numpy as jnp
from jax.experimental import pallas as pl
from jax.experimental.pallas import tpu as pltpu


def _round_up(n, m):
    return ((n + m - 1) // m) * m


def _anet_kernel(x_ref, w1_ref, b1_ref, w2_ref, b2_ref, w3_ref, b3_ref, o_ref):
    x = x_ref[...]

    # fc1 + relu (MXU accumulates in f32; bias-add / ReLU stay f32 on the VPU)
    h1 = jnp.dot(x, w1_ref[...], preferred_element_type=jnp.float32) + b1_ref[...]
    h1 = jnp.maximum(h1, 0.0)

    # fc2 + relu
    h2 = jnp.dot(h1.astype(w2_ref.dtype), w2_ref[...],
                 preferred_element_type=jnp.float32) + b2_ref[...]
    h2 = jnp.maximum(h2, 0.0)

    # out (logits) over the real output_size columns only (no padding/masking)
    logits = jnp.dot(h2.astype(w3_ref.dtype), w3_ref[...],
                     preferred_element_type=jnp.float32) + b3_ref[...]

    # numerically stable softmax over dim=1; exact division so rows sum to 1
    # to f32 rounding (this kernel is DMA-bound -> the divide is free)
    m = jnp.max(logits, axis=1, keepdims=True)
    e = jnp.exp(logits - m)
    denom = jnp.sum(e, axis=1, keepdims=True)
    o_ref[...] = (e / denom).astype(o_ref.dtype)


def anet_forward(x, params, *, block_b=None, use_bf16=True):
    """x: [B, input_size + 1] float32. Returns softmax probs [B, output_size] f32."""
    w1, b1, w2, b2, w3, b3 = params
    B, in_dim = x.shape
    hid = w1.shape[1]
    out_dim = w3.shape[1]

    # bf16 packs 2 rows per sublane -> batch tiles must be multiples of 16.
    mult = 16 if use_bf16 else 8

    if block_b is None:
        if B <= 2 * mult:
            tb = _round_up(max(B, 1), mult)
        elif B <= 2048:
            # ~2 tiles: big enough to amortize per-step overhead, and the
            # "parallel" batch axis gives both v7x TensorCores work.
            tb = _round_up((B + 1) // 2, mult)
        else:
            tb = 1024
    else:
        tb = _round_up(block_b, mult)

    b_pad = _round_up(B, tb)
    grid = (b_pad // tb,)

    # Only the batch axis is (cheaply) padded; zero rows are sliced off at the end.
    xp = x if b_pad == B else jnp.pad(x, ((0, b_pad - B), (0, 0)))

    if use_bf16:
        # bf16 MXU operands on every generation (v5e MXU is bf16-native and f32
        # operands decompose into multi-pass matmuls). Biases stay f32 so all
        # elementwise math and MXU accumulation remain f32.
        xp = xp.astype(jnp.bfloat16)
        w1c = w1.astype(jnp.bfloat16)
        w2c = w2.astype(jnp.bfloat16)
        w3c = w3.astype(jnp.bfloat16)
    else:
        w1c, w2c, w3c = w1, w2, w3

    # Advisory cost estimate with the real (unpadded-feature) dims.
    flops = 2 * b_pad * (in_dim * hid + hid * hid + hid * out_dim)
    bytes_accessed = int(
        xp.size * xp.dtype.itemsize
        + sum(int(a.size) * a.dtype.itemsize for a in (w1c, b1, w2c, b2, w3c, b3))
        + b_pad * out_dim * 4)

    out = pl.pallas_call(
        _anet_kernel,
        out_shape=jax.ShapeDtypeStruct((b_pad, out_dim), jnp.float32),
        grid=grid,
        in_specs=[
            pl.BlockSpec((tb, in_dim), lambda i: (i, 0)),     # x: batch-tiled, unpadded
            pl.BlockSpec((in_dim, hid), lambda i: (0, 0)),    # weights/biases stay
            pl.BlockSpec((1, hid), lambda i: (0, 0)),         # VMEM-resident
            pl.BlockSpec((hid, hid), lambda i: (0, 0)),
            pl.BlockSpec((1, hid), lambda i: (0, 0)),
            pl.BlockSpec((hid, out_dim), lambda i: (0, 0)),
            pl.BlockSpec((1, out_dim), lambda i: (0, 0)),
        ],
        out_specs=pl.BlockSpec((tb, out_dim), lambda i: (i, 0)),
        compiler_params=pltpu.CompilerParams(
            dimension_semantics=("parallel",)),                # v7x 2-TC sharding
        cost_estimate=pl.CostEstimate(
            flops=int(flops),
            transcendentals=int(b_pad * out_dim),
            bytes_accessed=bytes_accessed),
    )(xp, w1c, b1, w2c, b2, w3c, b3)

    return out[:B] if b_pad != B else out


def init_params(key, input_size, output_size, hidden=64):
    """Deterministic synthetic parameters (shapes match the PyTorch module)."""
    in_dim = input_size + 1
    k = jax.random.split(key, 6)

    def lin(kw, kb, fan_in, fan_out):
        bound = 1.0 / jnp.sqrt(fan_in)
        w = jax.random.uniform(kw, (fan_in, fan_out), jnp.float32, -bound, bound)
        b = jax.random.uniform(kb, (1, fan_out), jnp.float32, -bound, bound)
        return w, b

    w1, b1 = lin(k[0], k[1], in_dim, hidden)
    w2, b2 = lin(k[2], k[3], hidden, hidden)
    w3, b3 = lin(k[4], k[5], hidden, output_size)
    return (w1, b1, w2, b2, w3, b3)


if __name__ == "__main__":
    # Shapes consistent with the module: input_size=15 -> fc1 takes 16 feats.
    input_size = 15
    output_size = 16
    batch = 200  # not a multiple of the batch tile -> exercises row padding

    key = jax.random.PRNGKey(0)
    kx, kp = jax.random.split(key)
    x = jax.random.normal(kx, (batch, input_size + 1), dtype=jnp.float32)
    params = init_params(kp, input_size, output_size)

    # Pure-JAX reference (same math, unpadded).
    w1, b1, w2, b2, w3, b3 = params
    h1 = jnp.maximum(x @ w1 + b1, 0.0)
    h2 = jnp.maximum(h1 @ w2 + b2, 0.0)
    ref = jax.nn.softmax(h2 @ w3 + b3, axis=1)

    # f32-operand path.
    probs = anet_forward(x, params, use_bf16=False)
    jax.block_until_ready(probs)
    assert probs.shape == (batch, output_size)
    assert jnp.allclose(probs, ref, atol=2e-3, rtol=2e-3)
    # Exact division in the softmax -> rows normalize to f32 precision.
    assert jnp.allclose(jnp.sum(probs, axis=1), 1.0, atol=1e-4)

    # bf16 MXU-operand path (default on all generations; f32 accumulation).
    probs_bf16 = anet_forward(x, params, use_bf16=True)
    jax.block_until_ready(probs_bf16)
    assert probs_bf16.shape == (batch, output_size)
    assert jnp.allclose(probs_bf16, ref, atol=5e-2, rtol=5e-2)
    assert jnp.allclose(jnp.sum(probs_bf16, axis=1), 1.0, atol=1e-4)

    print("KERNEL_OK")
</pallas_src>

<mosaic_0001>
module attributes {stable_mosaic.version = 11 : i64} {
  func.func @_anet_kernel(%arg0: i32, %arg1: memref<104x16xf32, #tpu.memory_space<vmem>>, %arg2: memref<16x64xf32, #tpu.memory_space<vmem>>, %arg3: memref<1x64xf32, #tpu.memory_space<vmem>>, %arg4: memref<64x64xf32, #tpu.memory_space<vmem>>, %arg5: memref<1x64xf32, #tpu.memory_space<vmem>>, %arg6: memref<64x16xf32, #tpu.memory_space<vmem>>, %arg7: memref<1x16xf32, #tpu.memory_space<vmem>>, %arg8: memref<104x16xf32, #tpu.memory_space<vmem>>) attributes {dimension_semantics = [#tpu.dimension_semantics<parallel>], iteration_bounds = array<i64: 2>, scalar_prefetch = 0 : i64, scratch_operands = 0 : i64, tpu.core_type = #tpu.core_type<tc>, window_params = [{transform_indices = @transform_0, window_bounds = array<i64: 104, 16>}, {pipeline_mode = #tpu.pipeline_mode<synchronous>, transform_indices = @transform_1, window_bounds = array<i64: 16, 64>}, {pipeline_mode = #tpu.pipeline_mode<synchronous>, transform_indices = @transform_2, window_bounds = array<i64: 1, 64>}, {pipeline_mode = #tpu.pipeline_mode<synchronous>, transform_indices = @transform_3, window_bounds = array<i64: 64, 64>}, {pipeline_mode = #tpu.pipeline_mode<synchronous>, transform_indices = @transform_4, window_bounds = array<i64: 1, 64>}, {pipeline_mode = #tpu.pipeline_mode<synchronous>, transform_indices = @transform_5, window_bounds = array<i64: 64, 16>}, {pipeline_mode = #tpu.pipeline_mode<synchronous>, transform_indices = @transform_6, window_bounds = array<i64: 1, 16>}, {transform_indices = @transform_7, window_bounds = array<i64: 104, 16>}]} {
    %c0 = arith.constant 0 : index
    %c0_0 = arith.constant 0 : index
    %0 = vector.load %arg1[%c0, %c0_0] : memref<104x16xf32, #tpu.memory_space<vmem>>, vector<104x16xf32>
    %c0_1 = arith.constant 0 : index
    %c0_2 = arith.constant 0 : index
    %1 = vector.load %arg2[%c0_1, %c0_2] : memref<16x64xf32, #tpu.memory_space<vmem>>, vector<16x64xf32>
    %cst = arith.constant dense<0.000000e+00> : vector<104x64xf32>
    %2 = tpu.matmul %0, %1, %cst {dimension_numbers = #tpu.dot_dimension_numbers<[1], [0], [0], [1], [0, 0, 1, 1], [], []>} : vector<104x16xf32>, vector<16x64xf32>, vector<104x64xf32> -> vector<104x64xf32>
    %c0_3 = arith.constant 0 : index
    %c0_4 = arith.constant 0 : index
    %3 = vector.load %arg3[%c0_3, %c0_4] : memref<1x64xf32, #tpu.memory_space<vmem>>, vector<1x64xf32>
    %4 = vector.broadcast %3 : vector<1x64xf32> to vector<104x64xf32>
    %5 = arith.addf %2, %4 : vector<104x64xf32>
    %cst_5 = arith.constant 0.000000e+00 : f32
    %6 = vector.broadcast %cst_5 : f32 to vector<104x64xf32>
    %7 = arith.maximumf %5, %6 : vector<104x64xf32>
    %c0_6 = arith.constant 0 : index
    %c0_7 = arith.constant 0 : index
    %8 = vector.load %arg4[%c0_6, %c0_7] : memref<64x64xf32, #tpu.memory_space<vmem>>, vector<64x64xf32>
    %cst_8 = arith.constant dense<0.000000e+00> : vector<104x64xf32>
    %9 = tpu.matmul %7, %8, %cst_8 {dimension_numbers = #tpu.dot_dimension_numbers<[1], [0], [0], [1], [0, 0, 1, 1], [], []>} : vector<104x64xf32>, vector<64x64xf32>, vector<104x64xf32> -> vector<104x64xf32>
    %c0_9 = arith.constant 0 : index
    %c0_10 = arith.constant 0 : index
    %10 = vector.load %arg5[%c0_9, %c0_10] : memref<1x64xf32, #tpu.memory_space<vmem>>, vector<1x64xf32>
    %11 = vector.broadcast %10 : vector<1x64xf32> to vector<104x64xf32>
    %12 = arith.addf %9, %11 : vector<104x64xf32>
    %cst_11 = arith.constant 0.000000e+00 : f32
    %13 = vector.broadcast %cst_11 : f32 to vector<104x64xf32>
    %14 = arith.maximumf %12, %13 : vector<104x64xf32>
    %c0_12 = arith.constant 0 : index
    %c0_13 = arith.constant 0 : index
    %15 = vector.load %arg6[%c0_12, %c0_13] : memref<64x16xf32, #tpu.memory_space<vmem>>, vector<64x16xf32>
    %cst_14 = arith.constant dense<0.000000e+00> : vector<104x16xf32>
    %16 = tpu.matmul %14, %15, %cst_14 {dimension_numbers = #tpu.dot_dimension_numbers<[1], [0], [0], [1], [0, 0, 1, 1], [], []>} : vector<104x64xf32>, vector<64x16xf32>, vector<104x16xf32> -> vector<104x16xf32>
    %c0_15 = arith.constant 0 : index
    %c0_16 = arith.constant 0 : index
    %17 = vector.load %arg7[%c0_15, %c0_16] : memref<1x16xf32, #tpu.memory_space<vmem>>, vector<1x16xf32>
    %18 = vector.broadcast %17 : vector<1x16xf32> to vector<104x16xf32>
    %19 = arith.addf %16, %18 : vector<104x16xf32>
    %cst_17 = arith.constant dense<0xFF800000> : vector<104xf32>
    %20 = vector.multi_reduction <maximumf>, %19, %cst_17 [1] : vector<104x16xf32> to vector<104xf32>
    %21 = vector.shape_cast %20 : vector<104xf32> to vector<104x1xf32>
    %22 = vector.broadcast %21 : vector<104x1xf32> to vector<104x16xf32>
    %23 = arith.subf %19, %22 : vector<104x16xf32>
    %24 = math.exp %23 : vector<104x16xf32>
    %cst_18 = arith.constant dense<0.000000e+00> : vector<104xf32>
    %25 = vector.multi_reduction <add>, %24, %cst_18 [1] : vector<104x16xf32> to vector<104xf32>
    %26 = vector.shape_cast %25 : vector<104xf32> to vector<104x1xf32>
    %27 = vector.broadcast %26 : vector<104x1xf32> to vector<104x16xf32>
    %28 = arith.divf %24, %27 : vector<104x16xf32>
    %c0_19 = arith.constant 0 : index
    %c0_20 = arith.constant 0 : index
    %29 = vector.load %arg8[%c0_19, %c0_20] : memref<104x16xf32, #tpu.memory_space<vmem>>, vector<104x16xf32>
    tpu.vector_store %arg8[%c0_19, %c0_20], %28 {strides = array<i32>} : memref<104x16xf32, #tpu.memory_space<vmem>>, vector<104x16xf32>,
    return
  }
  func.func @transform_0(%arg0: i32) -> (i32, i32) {
    %c0_i32 = arith.constant 0 : i32
    %c0_i32_0 = arith.constant 0 : i32
    return %arg0, %c0_i32 : i32, i32
  }
  func.func @transform_1(%arg0: i32) -> (i32, i32) {
    %c0_i32 = arith.constant 0 : i32
    %c0_i32_0 = arith.constant 0 : i32
    %c0_i32_1 = arith.constant 0 : i32
    return %c0_i32, %c0_i32_0 : i32, i32
  }
  func.func @transform_2(%arg0: i32) -> (i32, i32) {
    %c0_i32 = arith.constant 0 : i32
    %c0_i32_0 = arith.constant 0 : i32
    %c0_i32_1 = arith.constant 0 : i32
    return %c0_i32, %c0_i32_0 : i32, i32
  }
  func.func @transform_3(%arg0: i32) -> (i32, i32) {
    %c0_i32 = arith.constant 0 : i32
    %c0_i32_0 = arith.constant 0 : i32
    %c0_i32_1 = arith.constant 0 : i32
    return %c0_i32, %c0_i32_0 : i32, i32
  }
  func.func @transform_4(%arg0: i32) -> (i32, i32) {
    %c0_i32 = arith.constant 0 : i32
    %c0_i32_0 = arith.constant 0 : i32
    %c0_i32_1 = arith.constant 0 : i32
    return %c0_i32, %c0_i32_0 : i32, i32
  }
  func.func @transform_5(%arg0: i32) -> (i32, i32) {
    %c0_i32 = arith.constant 0 : i32
    %c0_i32_0 = arith.constant 0 : i32
    %c0_i32_1 = arith.constant 0 : i32
    return %c0_i32, %c0_i32_0 : i32, i32
  }
  func.func @transform_6(%arg0: i32) -> (i32, i32) {
    %c0_i32 = arith.constant 0 : i32
    %c0_i32_0 = arith.constant 0 : i32
    %c0_i32_1 = arith.constant 0 : i32
    return %c0_i32, %c0_i32_0 : i32, i32
  }
  func.func @transform_7(%arg0: i32) -> (i32, i32) {
    %c0_i32 = arith.constant 0 : i32
    %c0_i32_0 = arith.constant 0 : i32
    return %arg0, %c0_i32 : i32, i32
  }
}

</mosaic_0001>

<llo_original>
// kernel: tpu_custom_call.1
$region0: #{tpu_custom_call.1}
  #allocation0 [shape = 'u32[]', space=smem, size = 0x4, offset = 0x4, fixed_abs, tag = 'smem constant byte address 0x4 - core index']
  #allocation1 [shape = 'u32[144,128]{1,0:T(1,128)}', space=vmem, size = 0x12000, scoped, tag = 'internal scratch']
  %s0 = inlined_call_operand.vmem [shape: f32[208,16], index: 0, kind: input, shape index: {}]
  %s1 = inlined_call_operand.vmem [shape: f32[16,64], index: 1, kind: input, shape index: {}]
  %s2 = inlined_call_operand.vmem [shape: f32[1,64], index: 2, kind: input, shape index: {}]
  %s3 = inlined_call_operand.vmem [shape: f32[64,64], index: 3, kind: input, shape index: {}]
  %s4 = inlined_call_operand.vmem [shape: f32[1,64], index: 4, kind: input, shape index: {}]
  %s5 = inlined_call_operand.vmem [shape: f32[64,16], index: 5, kind: input, shape index: {}]
  %s6 = inlined_call_operand.vmem [shape: f32[1,16], index: 6, kind: input, shape index: {}]
  %s7 = inlined_call_operand.vmem [shape: f32[208,16], index: 7, kind: output, shape index: {}]
  %s8 = sld [smem:[#allocation0]]
  $region61: #{tpu_custom_call.1} parent=0
    _
  %s10 = ssub.s32 1, %s8
  %s11 = scalar_select 0, %s10, %s8
  loop: start=0, step=1, limit=4
  $region2: #{tpu_custom_call.1} parent=0 // loop_pre_header
    _
  $region3: #{tpu_custom_call.1} parent=0 // loop_header
    %s13 = sphi 0, %s17
    %p14 = scmp.ge.s32.totalorder %s13, 4
    %s23 = sphi 0, %s25
    %s26 = sphi 0, %s23
    %s27 = sphi 0, %s26
    %s43 = sphi 0, %s27
    %s47 = sphi 0, %s47
    %s49 = sphi 0, %s47
    %s50 = sphi 0, %s49
    %s64 = sphi 0, %s50
    %s68 = sphi 0, %s68
    %s70 = sphi 0, %s68
    %s71 = sphi 0, %s70
    %s85 = sphi 0, %s71
    %s89 = sphi 0, %s89
    %s91 = sphi 0, %s89
    %s92 = sphi 0, %s91
    %s106 = sphi 0, %s92
    %s110 = sphi 0, %s110
    %s112 = sphi 0, %s110
    %s113 = sphi 0, %s112
    %s127 = sphi 0, %s113
    %s131 = sphi 0, %s131
    %s133 = sphi 0, %s131
    %s134 = sphi 0, %s133
    %s148 = sphi 0, %s134
    %s152 = sphi 0, %s152
    %s154 = sphi 0, %s152
    %s155 = sphi 0, %s154
    %s169 = sphi 0, %s155
    %s175 = sphi 0, %s177
    %s178 = sphi 0, %s175
    %s179 = sphi 0, %s178
    %s195 = sphi 0, %s179
  $region4: #{tpu_custom_call.1} parent=0 // loop_header_branch
    %16 = sbr.rel (%p14) target = $region8
  $region5: #{tpu_custom_call.1} parent=0 // loop_body
    %s18 = ssub.s32 %s13, 1
    %s19 = ssub.s32 %s13, 2
    %s20 = sadd.s32 %s13, 1
    %s21 = ssub.s32 %s13, %s20
    %p22 = scmp.eq.s32.totalorder %s21, 0
    %s24 = sadd.s32 %s23, 1
    %s25 = scalar_select %p22, %s23, %s24
    %p28 = pneg %p22
    %p29 = scmp.eq.s32.totalorder %s13, 1
    %p30 = por %p28, %p29
    %p31 = scmp.ne.s32.totalorder %s23, %s26
    %p32 = scmp.eq.s32.totalorder %s13, 0
    %p33 = por %p31, %p32
    %p34 = scmp.ne.s32.totalorder %s23, %s26
    %p35 = scmp.eq.s32.totalorder %s18, 1
    %p36 = por %p34, %p35
    %p37 = scmp.ne.s32.totalorder %s26, %s27
    %p38 = scmp.eq.s32.totalorder %s18, 0
    %p39 = por %p37, %p38
    %p40 = scmp.ne.s32.totalorder %s26, %s27
    %p41 = scmp.eq.s32.totalorder %s19, 1
    %p42 = por %p40, %p41
    %p44 = scmp.ne.s32.totalorder %s27, %s43
    %p45 = scmp.eq.s32.totalorder %s19, 0
    %p46 = por %p44, %p45
    %s48 = sadd.s32 %s47, 1
    %p51 = scmp.eq.s32.totalorder %s13, 1
    %p52 = scmp.ne.s32.totalorder %s47, %s49
    %p53 = scmp.eq.s32.totalorder %s13, 0
    %p54 = por %p52, %p53
    %p55 = scmp.ne.s32.totalorder %s47, %s49
    %p56 = scmp.eq.s32.totalorder %s18, 1
    %p57 = por %p55, %p56
    %p58 = scmp.ne.s32.totalorder %s49, %s50
    %p59 = scmp.eq.s32.totalorder %s18, 0
    %p60 = por %p58, %p59
    %p61 = scmp.ne.s32.totalorder %s49, %s50
    %p62 = scmp.eq.s32.totalorder %s19, 1
    %p63 = por %p61, %p62
    %p65 = scmp.ne.s32.totalorder %s50, %s64
    %p66 = scmp.eq.s32.totalorder %s19, 0
    %p67 = por %p65, %p66
    %s69 = sadd.s32 %s68, 1
    %p72 = scmp.eq.s32.totalorder %s13, 1
    %p73 = scmp.ne.s32.totalorder %s68, %s70
    %p74 = scmp.eq.s32.totalorder %s13, 0
    %p75 = por %p73, %p74
    %p76 = scmp.ne.s32.totalorder %s68, %s70
    %p77 = scmp.eq.s32.totalorder %s18, 1
    %p78 = por %p76, %p77
    %p79 = scmp.ne.s32.totalorder %s70, %s71
    %p80 = scmp.eq.s32.totalorder %s18, 0
    %p81 = por %p79, %p80
    %p82 = scmp.ne.s32.totalorder %s70, %s71
    %p83 = scmp.eq.s32.totalorder %s19, 1
    %p84 = por %p82, %p83
    %p86 = scmp.ne.s32.totalorder %s71, %s85
    %p87 = scmp.eq.s32.totalorder %s19, 0
    %p88 = por %p86, %p87
    %s90 = sadd.s32 %s89, 1
    %p93 = scmp.eq.s32.totalorder %s13, 1
    %p94 = scmp.ne.s32.totalorder %s89, %s91
    %p95 = scmp.eq.s32.totalorder %s13, 0
    %p96 = por %p94, %p95
    %p97 = scmp.ne.s32.totalorder %s89, %s91
    %p98 = scmp.eq.s32.totalorder %s18, 1
    %p99 = por %p97, %p98
    %p100 = scmp.ne.s32.totalorder %s91, %s92
    %p101 = scmp.eq.s32.totalorder %s18, 0
    %p102 = por %p100, %p101
    %p103 = scmp.ne.s32.totalorder %s91, %s92
    %p104 = scmp.eq.s32.totalorder %s19, 1
    %p105 = por %p103, %p104
    %p107 = scmp.ne.s32.totalorder %s92, %s106
    %p108 = scmp.eq.s32.totalorder %s19, 0
    %p109 = por %p107, %p108
    %s111 = sadd.s32 %s110, 1
    %p114 = scmp.eq.s32.totalorder %s13, 1
    %p115 = scmp.ne.s32.totalorder %s110, %s112
    %p116 = scmp.eq.s32.totalorder %s13, 0
    %p117 = por %p115, %p116
    %p118 = scmp.ne.s32.totalorder %s110, %s112
    %p119 = scmp.eq.s32.totalorder %s18, 1
    %p120 = por %p118, %p119
    %p121 = scmp.ne.s32.totalorder %s112, %s113
    %p122 = scmp.eq.s32.totalorder %s18, 0
    %p123 = por %p121, %p122
    %p124 = scmp.ne.s32.totalorder %s112, %s113
    %p125 = scmp.eq.s32.totalorder %s19, 1
    %p126 = por %p124, %p125
    %p128 = scmp.ne.s32.totalorder %s113, %s127
    %p129 = scmp.eq.s32.totalorder %s19, 0
    %p130 = por %p128, %p129
    %s132 = sadd.s32 %s131, 1
    %p135 = scmp.eq.s32.totalorder %s13, 1
    %p136 = scmp.ne.s32.totalorder %s131, %s133
    %p137 = scmp.eq.s32.totalorder %s13, 0
    %p138 = por %p136, %p137
    %p139 = scmp.ne.s32.totalorder %s131, %s133
    %p140 = scmp.eq.s32.totalorder %s18, 1
    %p141 = por %p139, %p140
    %p142 = scmp.ne.s32.totalorder %s133, %s134
    %p143 = scmp.eq.s32.totalorder %s18, 0
    %p144 = por %p142, %p143
    %p145 = scmp.ne.s32.totalorder %s133, %s134
    %p146 = scmp.eq.s32.totalorder %s19, 1
    %p147 = por %p145, %p146
    %p149 = scmp.ne.s32.totalorder %s134, %s148
    %p150 = scmp.eq.s32.totalorder %s19, 0
    %p151 = por %p149, %p150
    %s153 = sadd.s32 %s152, 1
    %p156 = scmp.eq.s32.totalorder %s13, 1
    %p157 = scmp.ne.s32.totalorder %s152, %s154
    %p158 = scmp.eq.s32.totalorder %s13, 0
    %p159 = por %p157, %p158
    %p160 = scmp.ne.s32.totalorder %s152, %s154
    %p161 = scmp.eq.s32.totalorder %s18, 1
    %p162 = por %p160, %p161
    %p163 = scmp.ne.s32.totalorder %s154, %s155
    %p164 = scmp.eq.s32.totalorder %s18, 0
    %p165 = por %p163, %p164
    %p166 = scmp.ne.s32.totalorder %s154, %s155
    %p167 = scmp.eq.s32.totalorder %s19, 1
    %p168 = por %p166, %p167
    %p170 = scmp.ne.s32.totalorder %s155, %s169
    %p171 = scmp.eq.s32.totalorder %s19, 0
    %p172 = por %p170, %p171
    %s173 = ssub.s32 %s13, %s20
    %p174 = scmp.eq.s32.totalorder %s173, 0
    %s176 = sadd.s32 %s175, 1
    %s177 = scalar_select %p174, %s175, %s176
    %p180 = pneg %p174
    %p181 = scmp.eq.s32.totalorder %s13, 1
    %p182 = por %p180, %p181
    %p183 = scmp.ne.s32.totalorder %s175, %s178
    %p184 = scmp.eq.s32.totalorder %s13, 0
    %p185 = por %p183, %p184
    %p186 = scmp.ne.s32.totalorder %s175, %s178
    %p187 = scmp.eq.s32.totalorder %s18, 1
    %p188 = por %p186, %p187
    %p189 = scmp.ne.s32.totalorder %s178, %s179
    %p190 = scmp.eq.s32.totalorder %s18, 0
    %p191 = por %p189, %p190
    %p192 = scmp.ne.s32.totalorder %s178, %s179
    %p193 = scmp.eq.s32.totalorder %s19, 1
    %p194 = por %p192, %p193
    %p196 = scmp.ne.s32.totalorder %s179, %s195
    %p197 = scmp.eq.s32.totalorder %s19, 0
    %p198 = por %p196, %p197
    %p199 = scmp.le.s32.totalorder 1, %s13
    %p200 = scmp.lt.s32.totalorder %s13, 3
    %p201 = pnand %p199, %p200
    %p202 = pneg %p201
    // Predicated region
    $region9: #{tpu_custom_call.1} parent=5 // pred_check
      _
    $region10: #{tpu_custom_call.1} parent=5 // pred_check_branch
      %204 = sbr.rel (%p201) target = $region12
    $region11: #{tpu_custom_call.1} parent=5 // pred_region
      %s205 = ssub.s32 %s13, 1
      // Predicated region
      $region13: #{tpu_custom_call.1} parent=11 // pred_check
        %p206 = pneg %p60
      $region14: #{tpu_custom_call.1} parent=11 // pred_check_branch
        %208 = sbr.rel (%p206) target = $region16
      $region15: #{tpu_custom_call.1} parent=11 // pred_region
        _
      $region16: #{tpu_custom_call.1} parent=11 // pred_fallthru
        _
      // Predicated region
      $region17: #{tpu_custom_call.1} parent=11 // pred_check
        %p209 = pneg %p81
      $region18: #{tpu_custom_call.1} parent=11 // pred_check_branch
        %211 = sbr.rel (%p209) target = $region20
      $region19: #{tpu_custom_call.1} parent=11 // pred_region
        _
      $region20: #{tpu_custom_call.1} parent=11 // pred_fallthru
        _
      // Predicated region
      $region21: #{tpu_custom_call.1} parent=11 // pred_check
        %p212 = pneg %p102
      $region22: #{tpu_custom_call.1} parent=11 // pred_check_branch
        %214 = sbr.rel (%p212) target = $region24
      $region23: #{tpu_custom_call.1} parent=11 // pred_region
        _
      $region24: #{tpu_custom_call.1} parent=11 // pred_fallthru
        _
      // Predicated region
      $region25: #{tpu_custom_call.1} parent=11 // pred_check
        %p215 = pneg %p123
      $region26: #{tpu_custom_call.1} parent=11 // pred_check_branch
        %217 = sbr.rel (%p215) target = $region28
      $region27: #{tpu_custom_call.1} parent=11 // pred_region
        _
      $region28: #{tpu_custom_call.1} parent=11 // pred_fallthru
        _
      // Predicated region
      $region29: #{tpu_custom_call.1} parent=11 // pred_check
        %p218 = pneg %p144
      $region30: #{tpu_custom_call.1} parent=11 // pred_check_branch
        %220 = sbr.rel (%p218) target = $region32
      $region31: #{tpu_custom_call.1} parent=11 // pred_region
        _
      $region32: #{tpu_custom_call.1} parent=11 // pred_fallthru
        _
      // Predicated region
      $region33: #{tpu_custom_call.1} parent=11 // pred_check
        %p221 = pneg %p165
      $region34: #{tpu_custom_call.1} parent=11 // pred_check_branch
        %223 = sbr.rel (%p221) target = $region36
      $region35: #{tpu_custom_call.1} parent=11 // pred_region
        _
      $region36: #{tpu_custom_call.1} parent=11 // pred_fallthru
        _
    $region12: #{tpu_custom_call.1} parent=5 // pred_fallthru
      _
    %p224 = scmp.lt.s32.totalorder %s13, 2
    // Predicated region
    $region37: #{tpu_custom_call.1} parent=5 // pred_check
      %p225 = pneg %p224
    $region38: #{tpu_custom_call.1} parent=5 // pred_check_branch
      %227 = sbr.rel (%p225) target = $region40
    $region39: #{tpu_custom_call.1} parent=5 // pred_region
      // Predicated region
      $region41: #{tpu_custom_call.1} parent=39 // pred_check
        %p228 = pneg %p33
      $region42: #{tpu_custom_call.1} parent=39 // pred_check_branch
        %230 = sbr.rel (%p228) target = $region44
      $region43: #{tpu_custom_call.1} parent=39 // pred_region
        %s231 = smul.u32 13, %s13
        %p232 = scmp.lt.s32.totalorder %s231, 25
        %s233 = scalar_select %p232, %s231, 25
        %s234 = smul.addr %s233, 8
        %s235 = scalar_lea.vmem %s0, %s234
        %s236 = smul.u32 13, %s13
      $region44: #{tpu_custom_call.1} parent=39 // pred_fallthru
        _
    $region40: #{tpu_custom_call.1} parent=5 // pred_fallthru
      _
    %p237 = scmp.le.s32.totalorder 1, %s13
    %p238 = scmp.lt.s32.totalorder %s13, 3
    %p239 = pnand %p237, %p238
    %p240 = pneg %p239
    // Predicated region
    $region45: #{tpu_custom_call.1} parent=5 // pred_check
      _
    $region46: #{tpu_custom_call.1} parent=5 // pred_check_branch
      %242 = sbr.rel (%p239) target = $region48
    $region47: #{tpu_custom_call.1} parent=5 // pred_region
      %s243 = ssub.s32 %s13, 1
      %s244 = smul.u32 13, %s18
      %p245 = scmp.lt.s32.totalorder %s244, 25
      %s246 = scalar_select %p245, %s244, 25
      %s247 = smul.addr %s246, 8
      %s248 = scalar_lea.vmem %s0, %s247
      %p249 = pneg %p39
      %p250 = pneg %p36
      %p251 = pneg %p60
      %p252 = pneg %p57
      %p253 = pneg %p81
      %p254 = pneg %p78
      %p255 = pneg %p102
      %p256 = pneg %p99
      %p257 = pneg %p123
      %p258 = pneg %p120
      %p259 = pneg %p144
      %p260 = pneg %p141
      %p261 = pneg %p165
      %p262 = pneg %p162
      %p263 = pneg %p191
      %p264 = pneg %p188
      %s265 = smul.u32 13, %s18
      %p266 = scmp.lt.s32.totalorder %s265, 25
      %s267 = scalar_select %p266, %s265, 25
      %s268 = smul.addr %s267, 8
      %s269 = scalar_lea.vmem %s7, %s268
      %s270 = smul.u32 13, %s18
      %p271 = scmp.lt.s32.totalorder %s270, 25
      %s272 = scalar_select %p271, %s270, 25
      %s273 = smul.addr %s272, 8
      %s274 = scalar_lea.vmem %s0, %s273
      %s275 = smul.u32 13, %s18
      %s276 = smul.u32 13, %s18
      %p277 = scmp.lt.s32.totalorder %s276, 25
      %s278 = scalar_select %p277, %s276, 25
      %s279 = smul.addr %s278, 8
      %s280 = scalar_lea.vmem %s7, %s279
      %s281 = smul.u32 13, %s18
      %v282 = vld [vmem:[%s274] sm:$0xff]
      %v283 = vld [vmem:[%s274 + $0x8] sm:$0xff]
      %v284 = vld [vmem:[%s274 + $0x10] sm:$0xff]
      %v285 = vld [vmem:[%s274 + $0x18] sm:$0xff]
      %v286 = vld [vmem:[%s274 + $0x20] sm:$0xff]
      %v287 = vld [vmem:[%s274 + $0x28] sm:$0xff]
      %v288 = vld [vmem:[%s274 + $0x30] sm:$0xff]
      %v289 = vld [vmem:[%s274 + $0x38] sm:$0xff]
      %v290 = vld [vmem:[%s274 + $0x40] sm:$0xff]
      %v291 = vld [vmem:[%s274 + $0x48] sm:$0xff]
      %v292 = vld [vmem:[%s274 + $0x50] sm:$0xff]
      %v293 = vld [vmem:[%s274 + $0x58] sm:$0xff]
      %v294 = vld [vmem:[%s274 + $0x60] sm:$0xff]
      %v295 = vld [vmem:[%s1] sm:$0xff]
      %v296 = vld [vmem:[%s1 + $0x8] sm:$0xff]
      %v297 = vld [vmem:[%s2] sm:$0x1]
      %v299 = vlaneseq
      %v300 = vshrl.u32 %v299, 7
      %v301 = vsub.s32 0, %v300
      %v302 = vrot.slane %v297, %v301
      %vm304 = vcmask 130048
      %v306 = vsel %vm304, %v282, 0
      %v309 = vsel %vm304, %v283, 0
      %v312 = vsel %vm304, %v284, 0
      %v315 = vsel %vm304, %v285, 0
      %v318 = vsel %vm304, %v286, 0
      %v321 = vsel %vm304, %v287, 0
      %v324 = vsel %vm304, %v288, 0
      %v327 = vsel %vm304, %v289, 0
      %v330 = vsel %vm304, %v290, 0
      %v333 = vsel %vm304, %v291, 0
      %v336 = vsel %vm304, %v292, 0
      %v339 = vsel %vm304, %v293, 0
      %v342 = vsel %vm304, %v294, 0
      %344 = vmatprep.subr.mxu0 0.0
      %345 = vmatpush1.msra.mxu0 %v295
      %346 = vmatprep.subr.mxu0 0.0
      %347 = vmatpush1.msra.mxu0 %v296
      %348 = vmatprep.subr.mxu0 0.0
      %349 = vmatpush1.msra.mxu0 0.0
      %350 = vmatprep.subr.mxu0 0.0
      %351 = vmatpush1.msra.mxu0 0.0
      %352 = vmatprep.subr.mxu0 0.0
      %353 = vmatpush1.msra.mxu0 0.0
      %354 = vmatprep.subr.mxu0 0.0
      %355 = vmatpush1.msra.mxu0 0.0
      %356 = vmatprep.subr.mxu0 0.0
      %357 = vmatpush1.msra.mxu0 0.0
      %358 = vmatprep.subr.mxu0 0.0
      %359 = vmatpush1.msra.mxu0 0.0
      %360 = vmatprep.subr.mxu0 0.0
      %361 = vmatpush1.msra.mxu0 0.0
      %362 = vmatprep.subr.mxu0 0.0
      %363 = vmatpush1.msra.mxu0 0.0
      %364 = vmatprep.subr.mxu0 0.0
      %365 = vmatpush1.msra.mxu0 0.0
      %366 = vmatprep.subr.mxu0 0.0
      %367 = vmatpush1.msra.mxu0 0.0
      %368 = vmatprep.subr.mxu0 0.0
      %369 = vmatpush1.msra.mxu0 0.0
      %370 = vmatprep.subr.mxu0 0.0
      %371 = vmatpush1.msra.mxu0 0.0
      %372 = vmatprep.subr.mxu0 0.0
      %373 = vmatpush1.msra.mxu0 0.0
      %374 = vmatprep.subr.mxu0 0.0
      %375 = vmatpush1.msra.mxu0 0.0
      %376 = vmatprep.subr.mxu0 0.0
      %377 = vmatpush1.msra.mxu0 0.0
      %378 = vmatprep.subr.mxu0 0.0
      %379 = vmatpush1.msra.mxu0 0.0
      %380 = vmatprep.subr.mxu0 0.0
      %381 = vmatpush1.msra.mxu0 0.0
      %382 = vmatprep.subr.mxu0 0.0
      %383 = vmatpush1.msra.mxu0 0.0
      %384 = vmatprep.subr.mxu0 0.0
      %385 = vmatpush1.msra.mxu0 0.0
      %386 = vmatprep.subr.mxu0 0.0
      %387 = vmatpush1.msra.mxu0 0.0
      %388 = vmatprep.subr.mxu0 0.0
      %389 = vmatpush1.msra.mxu0 0.0
      %390 = vmatprep.subr.mxu0 0.0
      %391 = vmatpush1.msra.mxu0 0.0
      %392 = vmatprep.subr.mxu0 0.0
      %393 = vmatpush1.msra.mxu0 0.0
      %394 = vmatprep.subr.mxu0 0.0
      %395 = vmatpush1.msra.mxu0 0.0
      %396 = vmatprep.subr.mxu0 0.0
      %397 = vmatpush1.msra.mxu0 0.0
      %398 = vmatprep.subr.mxu0 0.0
      %399 = vmatpush1.msra.mxu0 0.0
      %400 = vmatprep.subr.mxu0 0.0
      %401 = vmatpush1.msra.mxu0 0.0
      %402 = vmatprep.subr.mxu0 0.0
      %403 = vmatpush1.msra.mxu0 0.0
      %404 = vmatprep.subr.mxu0 0.0
      %405 = vmatpush1.msra.mxu0 0.0
      %406 = vmatprep.subr.mxu0 0.0
      %407 = vmatpush1.msra.mxu0 0.0
      %408 = vmatprep.mubr.f32.mxu0 0.0
      %409 = vmatmul.mubr.f32.gmra.mrb[0].mxu0 %v306
      %v410 = vpop.f32.mrb[0].mxu0
      %v411 = vadd.f32 %v302, %v410
      %v412 = vpop.f32.mrb[0].mxu0
      %413 = vmatprep.mubr.f32.mxu0 0.0
      %414 = vmatmul.mubr.f32.gmra.mrb[0].mxu0 %v309
      %v415 = vpop.f32.mrb[0].mxu0
      %v416 = vadd.f32 %v302, %v415
      %v417 = vpop.f32.mrb[0].mxu0
      %418 = vmatprep.mubr.f32.mxu0 0.0
      %419 = vmatmul.mubr.f32.gmra.mrb[0].mxu0 %v312
      %v420 = vpop.f32.mrb[0].mxu0
      %v421 = vadd.f32 %v302, %v420
      %v422 = vpop.f32.mrb[0].mxu0
      %423 = vmatprep.mubr.f32.mxu0 0.0
      %424 = vmatmul.mubr.f32.gmra.mrb[0].mxu0 %v315
      %v425 = vpop.f32.mrb[0].mxu0
      %v426 = vadd.f32 %v302, %v425
      %v427 = vpop.f32.mrb[0].mxu0
      %428 = vmatprep.mubr.f32.mxu0 0.0
      %429 = vmatmul.mubr.f32.gmra.mrb[0].mxu0 %v318
      %v430 = vpop.f32.mrb[0].mxu0
      %v431 = vadd.f32 %v302, %v430
      %v432 = vpop.f32.mrb[0].mxu0
      %433 = vmatprep.mubr.f32.mxu0 0.0
      %434 = vmatmul.mubr.f32.gmra.mrb[0].mxu0 %v321
      %v435 = vpop.f32.mrb[0].mxu0
      %v436 = vadd.f32 %v302, %v435
      %v437 = vpop.f32.mrb[0].mxu0
      %438 = vmatprep.mubr.f32.mxu0 0.0
      %439 = vmatmul.mubr.f32.gmra.mrb[0].mxu0 %v324
      %v440 = vpop.f32.mrb[0].mxu0
      %v441 = vadd.f32 %v302, %v440
      %v442 = vpop.f32.mrb[0].mxu0
      %443 = vmatprep.mubr.f32.mxu0 0.0
      %444 = vmatmul.mubr.f32.gmra.mrb[0].mxu0 %v327
      %v445 = vpop.f32.mrb[0].mxu0
      %v446 = vadd.f32 %v302, %v445
      %v447 = vpop.f32.mrb[0].mxu0
      %448 = vmatprep.mubr.f32.mxu0 0.0
      %449 = vmatmul.mubr.f32.gmra.mrb[0].mxu0 %v330
      %v450 = vpop.f32.mrb[0].mxu0
      %v451 = vadd.f32 %v302, %v450
      %v452 = vpop.f32.mrb[0].mxu0
      %453 = vmatprep.mubr.f32.mxu0 0.0
      %454 = vmatmul.mubr.f32.gmra.mrb[0].mxu0 %v333
      %v455 = vpop.f32.mrb[0].mxu0
      %v456 = vadd.f32 %v302, %v455
      %v457 = vpop.f32.mrb[0].mxu0
      %458 = vmatprep.mubr.f32.mxu0 0.0
      %459 = vmatmul.mubr.f32.gmra.mrb[0].mxu0 %v336
      %v460 = vpop.f32.mrb[0].mxu0
      %v461 = vadd.f32 %v302, %v460
      %v462 = vpop.f32.mrb[0].mxu0
      %463 = vmatprep.mubr.f32.mxu0 0.0
      %464 = vmatmul.mubr.f32.gmra.mrb[0].mxu0 %v339
      %v465 = vpop.f32.mrb[0].mxu0
      %v466 = vadd.f32 %v302, %v465
      %v467 = vpop.f32.mrb[0].mxu0
      %468 = vmatprep.mubr.f32.mxu0 0.0
      %469 = vmatmul.mubr.f32.gmra.mrb[0].mxu0 %v342
      %v470 = vpop.f32.mrb[0].mxu0
      %v471 = vadd.f32 %v302, %v470
      %v472 = vpop.f32.mrb[0].mxu0
      %473 = vdwg.mxu0
      %v474 = vmax.f32 %v411, 0.0
      %v475 = vmax.f32 %v416, 0.0
      %v476 = vmax.f32 %v421, 0.0
      %v477 = vmax.f32 %v426, 0.0
      %v478 = vmax.f32 %v431, 0.0
      %v479 = vmax.f32 %v436, 0.0
      %v480 = vmax.f32 %v441, 0.0
      %v481 = vmax.f32 %v446, 0.0
      %v482 = vmax.f32 %v451, 0.0
      %v483 = vmax.f32 %v456, 0.0
      %v484 = vmax.f32 %v461, 0.0
      %v485 = vmax.f32 %v466, 0.0
      %v486 = vmax.f32 %v471, 0.0
      %v487 = vld [vmem:[%s3] sm:$0xff]
      %v488 = vld [vmem:[%s3 + $0x8] sm:$0xff]
      %v489 = vld [vmem:[%s3 + $0x10] sm:$0xff]
      %v490 = vld [vmem:[%s3 + $0x18] sm:$0xff]
      %v491 = vld [vmem:[%s3 + $0x20] sm:$0xff]
      %v492 = vld [vmem:[%s3 + $0x28] sm:$0xff]
      %v493 = vld [vmem:[%s3 + $0x30] sm:$0xff]
      %v494 = vld [vmem:[%s3 + $0x38] sm:$0xff]
      %v495 = vld [vmem:[%s4] sm:$0x1]
      %v497 = vlaneseq
      %v498 = vshrl.u32 %v497, 7
      %v499 = vsub.s32 0, %v498
      %v500 = vrot.slane %v495, %v499
      %vm502 = vcmask 523264
      %v504 = vsel %vm502, %v474, 0
      %v507 = vsel %vm502, %v475, 0
      %v510 = vsel %vm502, %v476, 0
      %v513 = vsel %vm502, %v477, 0
      %v516 = vsel %vm502, %v478, 0
      %v519 = vsel %vm502, %v479, 0
      %v522 = vsel %vm502, %v480, 0
      %v525 = vsel %vm502, %v481, 0
      %v528 = vsel %vm502, %v482, 0
      %v531 = vsel %vm502, %v483, 0
      %v534 = vsel %vm502, %v484, 0
      %v537 = vsel %vm502, %v485, 0
      %v540 = vsel %vm502, %v486, 0
      %542 = vmatprep.subr.mxu0 0.0
      %543 = vmatpush1.msra.mxu0 %v487
      %544 = vmatprep.subr.mxu0 0.0
      %545 = vmatpush1.msra.mxu0 %v488
      %546 = vmatprep.subr.mxu0 0.0
      %547 = vmatpush1.msra.mxu0 %v489
      %548 = vmatprep.subr.mxu0 0.0
      %549 = vmatpush1.msra.mxu0 %v490
      %550 = vmatprep.subr.mxu0 0.0
      %551 = vmatpush1.msra.mxu0 %v491
      %552 = vmatprep.subr.mxu0 0.0
      %553 = vmatpush1.msra.mxu0 %v492
      %554 = vmatprep.subr.mxu0 0.0
      %555 = vmatpush1.msra.mxu0 %v493
      %556 = vmatprep.subr.mxu0 0.0
      %557 = vmatpush1.msra.mxu0 %v494
      %558 = vmatprep.subr.mxu0 0.0
      %559 = vmatpush1.msra.mxu0 0.0
      %560 = vmatprep.subr.mxu0 0.0
      %561 = vmatpush1.msra.mxu0 0.0
      %562 = vmatprep.subr.mxu0 0.0
      %563 = vmatpush1.msra.mxu0 0.0
      %564 = vmatprep.subr.mxu0 0.0
      %565 = vmatpush1.msra.mxu0 0.0
      %566 = vmatprep.subr.mxu0 0.0
      %567 = vmatpush1.msra.mxu0 0.0
      %568 = vmatprep.subr.mxu0 0.0
      %569 = vmatpush1.msra.mxu0 0.0
      %570 = vmatprep.subr.mxu0 0.0
      %571 = vmatpush1.msra.mxu0 0.0
      %572 = vmatprep.subr.mxu0 0.0
      %573 = vmatpush1.msra.mxu0 0.0
      %574 = vmatprep.subr.mxu0 0.0
      %575 = vmatpush1.msra.mxu0 0.0
      %576 = vmatprep.subr.mxu0 0.0
      %577 = vmatpush1.msra.mxu0 0.0
      %578 = vmatprep.subr.mxu0 0.0
      %579 = vmatpush1.msra.mxu0 0.0
      %580 = vmatprep.subr.mxu0 0.0
      %581 = vmatpush1.msra.mxu0 0.0
      %582 = vmatprep.subr.mxu0 0.0
      %583 = vmatpush1.msra.mxu0 0.0
      %584 = vmatprep.subr.mxu0 0.0
      %585 = vmatpush1.msra.mxu0 0.0
      %586 = vmatprep.subr.mxu0 0.0
      %587 = vmatpush1.msra.mxu0 0.0
      %588 = vmatprep.subr.mxu0 0.0
      %589 = vmatpush1.msra.mxu0 0.0
      %590 = vmatprep.subr.mxu0 0.0
      %591 = vmatpush1.msra.mxu0 0.0
      %592 = vmatprep.subr.mxu0 0.0
      %593 = vmatpush1.msra.mxu0 0.0
      %594 = vmatprep.subr.mxu0 0.0
      %595 = vmatpush1.msra.mxu0 0.0
      %596 = vmatprep.subr.mxu0 0.0
      %597 = vmatpush1.msra.mxu0 0.0
      %598 = vmatprep.subr.mxu0 0.0
      %599 = vmatpush1.msra.mxu0 0.0
      %600 = vmatprep.subr.mxu0 0.0
      %601 = vmatpush1.msra.mxu0 0.0
      %602 = vmatprep.subr.mxu0 0.0
      %603 = vmatpush1.msra.mxu0 0.0
      %604 = vmatprep.subr.mxu0 0.0
      %605 = vmatpush1.msra.mxu0 0.0
      %606 = vmatprep.mubr.f32.mxu0 0.0
      %607 = vmatmul.mubr.f32.gmra.mrb[0].mxu0 %v504
      %v608 = vpop.f32.mrb[0].mxu0
      %v609 = vadd.f32 %v500, %v608
      %v610 = vpop.f32.mrb[0].mxu0
      %611 = vmatprep.mubr.f32.mxu0 0.0
      %612 = vmatmul.mubr.f32.gmra.mrb[0].mxu0 %v507
      %v613 = vpop.f32.mrb[0].mxu0
      %v614 = vadd.f32 %v500, %v613
      %v615 = vpop.f32.mrb[0].mxu0
      %616 = vmatprep.mubr.f32.mxu0 0.0
      %617 = vmatmul.mubr.f32.gmra.mrb[0].mxu0 %v510
      %v618 = vpop.f32.mrb[0].mxu0
      %v619 = vadd.f32 %v500, %v618
      %v620 = vpop.f32.mrb[0].mxu0
      %621 = vmatprep.mubr.f32.mxu0 0.0
      %622 = vmatmul.mubr.f32.gmra.mrb[0].mxu0 %v513
      %v623 = vpop.f32.mrb[0].mxu0
      %v624 = vadd.f32 %v500, %v623
      %v625 = vpop.f32.mrb[0].mxu0
      %626 = vmatprep.mubr.f32.mxu0 0.0
      %627 = vmatmul.mubr.f32.gmra.mrb[0].mxu0 %v516
      %v628 = vpop.f32.mrb[0].mxu0
      %v629 = vadd.f32 %v500, %v628
      %v630 = vpop.f32.mrb[0].mxu0
      %631 = vmatprep.mubr.f32.mxu0 0.0
      %632 = vmatmul.mubr.f32.gmra.mrb[0].mxu0 %v519
      %v633 = vpop.f32.mrb[0].mxu0
      %v634 = vadd.f32 %v500, %v633
      %v635 = vpop.f32.mrb[0].mxu0
      %636 = vmatprep.mubr.f32.mxu0 0.0
      %637 = vmatmul.mubr.f32.gmra.mrb[0].mxu0 %v522
      %v638 = vpop.f32.mrb[0].mxu0
      %v639 = vadd.f32 %v500, %v638
      %v640 = vpop.f32.mrb[0].mxu0
      %641 = vmatprep.mubr.f32.mxu0 0.0
      %642 = vmatmul.mubr.f32.gmra.mrb[0].mxu0 %v525
      %v643 = vpop.f32.mrb[0].mxu0
      %v644 = vadd.f32 %v500, %v643
      %v645 = vpop.f32.mrb[0].mxu0
      %646 = vmatprep.mubr.f32.mxu0 0.0
      %647 = vmatmul.mubr.f32.gmra.mrb[0].mxu0 %v528
      %v648 = vpop.f32.mrb[0].mxu0
      %v649 = vadd.f32 %v500, %v648
      %v650 = vpop.f32.mrb[0].mxu0
      %651 = vmatprep.mubr.f32.mxu0 0.0
      %652 = vmatmul.mubr.f32.gmra.mrb[0].mxu0 %v531
      %v653 = vpop.f32.mrb[0].mxu0
      %v654 = vadd.f32 %v500, %v653
      %v655 = vpop.f32.mrb[0].mxu0
      %656 = vmatprep.mubr.f32.mxu0 0.0
      %657 = vmatmul.mubr.f32.gmra.mrb[0].mxu0 %v534
      %v658 = vpop.f32.mrb[0].mxu0
      %v659 = vadd.f32 %v500, %v658
      %v660 = vpop.f32.mrb[0].mxu0
      %661 = vmatprep.mubr.f32.mxu0 0.0
      %662 = vmatmul.mubr.f32.gmra.mrb[0].mxu0 %v537
      %v663 = vpop.f32.mrb[0].mxu0
      %v664 = vadd.f32 %v500, %v663
      %v665 = vpop.f32.mrb[0].mxu0
      %666 = vmatprep.mubr.f32.mxu0 0.0
      %667 = vmatmul.mubr.f32.gmra.mrb[0].mxu0 %v540
      %v668 = vpop.f32.mrb[0].mxu0
      %v669 = vadd.f32 %v500, %v668
      %v670 = vpop.f32.mrb[0].mxu0
      %671 = vdwg.mxu0
      %v672 = vmax.f32 %v609, 0.0
      %v673 = vmax.f32 %v614, 0.0
      %v674 = vmax.f32 %v619, 0.0
      %v675 = vmax.f32 %v624, 0.0
      %v676 = vmax.f32 %v629, 0.0
      %v677 = vmax.f32 %v634, 0.0
      %v678 = vmax.f32 %v639, 0.0
      %v679 = vmax.f32 %v644, 0.0
      %v680 = vmax.f32 %v649, 0.0
      %v681 = vmax.f32 %v654, 0.0
      %v682 = vmax.f32 %v659, 0.0
      %v683 = vmax.f32 %v664, 0.0
      %v684 = vmax.f32 %v669, 0.0
      %v685 = vld [vmem:[%s5] sm:$0xff]
      %v686 = vld [vmem:[%s5 + $0x8] sm:$0xff]
      %v687 = vld [vmem:[%s5 + $0x10] sm:$0xff]
      %v688 = vld [vmem:[%s5 + $0x18] sm:$0xff]
      %v689 = vld [vmem:[%s5 + $0x20] sm:$0xff]
      %v690 = vld [vmem:[%s5 + $0x28] sm:$0xff]
      %v691 = vld [vmem:[%s5 + $0x30] sm:$0xff]
      %v692 = vld [vmem:[%s5 + $0x38] sm:$0xff]
      %v693 = vld [vmem:[%s6] sm:$0x1]
      %v695 = vlaneseq
      %v696 = vshrl.u32 %v695, 7
      %v697 = vsub.s32 0, %v696
      %v698 = vrot.slane %v693, %v697
      %v701 = vsel %vm502, %v672, 0
      %v704 = vsel %vm502, %v673, 0
      %v707 = vsel %vm502, %v674, 0
      %v710 = vsel %vm502, %v675, 0
      %v713 = vsel %vm502, %v676, 0
      %v716 = vsel %vm502, %v677, 0
      %v719 = vsel %vm502, %v678, 0
      %v722 = vsel %vm502, %v679, 0
      %v725 = vsel %vm502, %v680, 0
      %v728 = vsel %vm502, %v681, 0
      %v731 = vsel %vm502, %v682, 0
      %v734 = vsel %vm502, %v683, 0
      %v737 = vsel %vm502, %v684, 0
      %739 = vmatprep.subr.mxu0 0.0
      %740 = vmatpush1.msra.mxu0 %v685
      %741 = vmatprep.subr.mxu0 0.0
      %742 = vmatpush1.msra.mxu0 %v686
      %743 = vmatprep.subr.mxu0 0.0
      %744 = vmatpush1.msra.mxu0 %v687
      %745 = vmatprep.subr.mxu0 0.0
      %746 = vmatpush1.msra.mxu0 %v688
      %747 = vmatprep.subr.mxu0 0.0
      %748 = vmatpush1.msra.mxu0 %v689
      %749 = vmatprep.subr.mxu0 0.0
      %750 = vmatpush1.msra.mxu0 %v690
      %751 = vmatprep.subr.mxu0 0.0
      %752 = vmatpush1.msra.mxu0 %v691
      %753 = vmatprep.subr.mxu0 0.0
      %754 = vmatpush1.msra.mxu0 %v692
      %755 = vmatprep.subr.mxu0 0.0
      %756 = vmatpush1.msra.mxu0 0.0
      %757 = vmatprep.subr.mxu0 0.0
      %758 = vmatpush1.msra.mxu0 0.0
      %759 = vmatprep.subr.mxu0 0.0
      %760 = vmatpush1.msra.mxu0 0.0
      %761 = vmatprep.subr.mxu0 0.0
      %762 = vmatpush1.msra.mxu0 0.0
      %763 = vmatprep.subr.mxu0 0.0
      %764 = vmatpush1.msra.mxu0 0.0
      %765 = vmatprep.subr.mxu0 0.0
      %766 = vmatpush1.msra.mxu0 0.0
      %767 = vmatprep.subr.mxu0 0.0
      %768 = vmatpush1.msra.mxu0 0.0
      %769 = vmatprep.subr.mxu0 0.0
      %770 = vmatpush1.msra.mxu0 0.0
      %771 = vmatprep.subr.mxu0 0.0
      %772 = vmatpush1.msra.mxu0 0.0
      %773 = vmatprep.subr.mxu0 0.0
      %774 = vmatpush1.msra.mxu0 0.0
      %775 = vmatprep.subr.mxu0 0.0
      %776 = vmatpush1.msra.mxu0 0.0
      %777 = vmatprep.subr.mxu0 0.0
      %778 = vmatpush1.msra.mxu0 0.0
      %779 = vmatprep.subr.mxu0 0.0
      %780 = vmatpush1.msra.mxu0 0.0
      %781 = vmatprep.subr.mxu0 0.0
      %782 = vmatpush1.msra.mxu0 0.0
      %783 = vmatprep.subr.mxu0 0.0
      %784 = vmatpush1.msra.mxu0 0.0
      %785 = vmatprep.subr.mxu0 0.0
      %786 = vmatpush1.msra.mxu0 0.0
      %787 = vmatprep.subr.mxu0 0.0
      %788 = vmatpush1.msra.mxu0 0.0
      %789 = vmatprep.subr.mxu0 0.0
      %790 = vmatpush1.msra.mxu0 0.0
      %791 = vmatprep.subr.mxu0 0.0
      %792 = vmatpush1.msra.mxu0 0.0
      %793 = vmatprep.subr.mxu0 0.0
      %794 = vmatpush1.msra.mxu0 0.0
      %795 = vmatprep.subr.mxu0 0.0
      %796 = vmatpush1.msra.mxu0 0.0
      %797 = vmatprep.subr.mxu0 0.0
      %798 = vmatpush1.msra.mxu0 0.0
      %799 = vmatprep.subr.mxu0 0.0
      %800 = vmatpush1.msra.mxu0 0.0
      %801 = vmatprep.subr.mxu0 0.0
      %802 = vmatpush1.msra.mxu0 0.0
      %803 = vmatprep.mubr.f32.mxu0 0.0
      %804 = vmatmul.mubr.f32.gmra.mrb[0].mxu0 %v701
      %v805 = vpop.f32.mrb[0].mxu0
      %v806 = vadd.f32 %v698, %v805
      %v807 = vpop.f32.mrb[0].mxu0
      %808 = vmatprep.mubr.f32.mxu0 0.0
      %809 = vmatmul.mubr.f32.gmra.mrb[0].mxu0 %v704
      %v810 = vpop.f32.mrb[0].mxu0
      %v811 = vadd.f32 %v698, %v810
      %v812 = vpop.f32.mrb[0].mxu0
      %813 = vmatprep.mubr.f32.mxu0 0.0
      %814 = vmatmul.mubr.f32.gmra.mrb[0].mxu0 %v707
      %v815 = vpop.f32.mrb[0].mxu0
      %v816 = vadd.f32 %v698, %v815
      %v817 = vpop.f32.mrb[0].mxu0
      %818 = vmatprep.mubr.f32.mxu0 0.0
      %819 = vmatmul.mubr.f32.gmra.mrb[0].mxu0 %v710
      %v820 = vpop.f32.mrb[0].mxu0
      %v821 = vadd.f32 %v698, %v820
      %v822 = vpop.f32.mrb[0].mxu0
      %823 = vmatprep.mubr.f32.mxu0 0.0
      %824 = vmatmul.mubr.f32.gmra.mrb[0].mxu0 %v713
      %v825 = vpop.f32.mrb[0].mxu0
      %v826 = vadd.f32 %v698, %v825
      %v827 = vpop.f32.mrb[0].mxu0
      %828 = vmatprep.mubr.f32.mxu0 0.0
      %829 = vmatmul.mubr.f32.gmra.mrb[0].mxu0 %v716
      %v830 = vpop.f32.mrb[0].mxu0
      %v831 = vadd.f32 %v698, %v830
      %v832 = vpop.f32.mrb[0].mxu0
      %833 = vmatprep.mubr.f32.mxu0 0.0
      %834 = vmatmul.mubr.f32.gmra.mrb[0].mxu0 %v719
      %v835 = vpop.f32.mrb[0].mxu0
      %v836 = vadd.f32 %v698, %v835
      %v837 = vpop.f32.mrb[0].mxu0
      %838 = vmatprep.mubr.f32.mxu0 0.0
      %839 = vmatmul.mubr.f32.gmra.mrb[0].mxu0 %v722
      %v840 = vpop.f32.mrb[0].mxu0
      %v841 = vadd.f32 %v698, %v840
      %v842 = vpop.f32.mrb[0].mxu0
      %843 = vmatprep.mubr.f32.mxu0 0.0
      %844 = vmatmul.mubr.f32.gmra.mrb[0].mxu0 %v725
      %v845 = vpop.f32.mrb[0].mxu0
      %v846 = vadd.f32 %v698, %v845
      %v847 = vpop.f32.mrb[0].mxu0
      %848 = vmatprep.mubr.f32.mxu0 0.0
      %849 = vmatmul.mubr.f32.gmra.mrb[0].mxu0 %v728
      %v850 = vpop.f32.mrb[0].mxu0
      %v851 = vadd.f32 %v698, %v850
      %v852 = vpop.f32.mrb[0].mxu0
      %853 = vmatprep.mubr.f32.mxu0 0.0
      %854 = vmatmul.mubr.f32.gmra.mrb[0].mxu0 %v731
      %v855 = vpop.f32.mrb[0].mxu0
      %v856 = vadd.f32 %v698, %v855
      %v857 = vpop.f32.mrb[0].mxu0
      %858 = vmatprep.mubr.f32.mxu0 0.0
      %859 = vmatmul.mubr.f32.gmra.mrb[0].mxu0 %v734
      %v860 = vpop.f32.mrb[0].mxu0
      %v861 = vadd.f32 %v698, %v860
      %v862 = vpop.f32.mrb[0].mxu0
      %863 = vmatprep.mubr.f32.mxu0 0.0
      %864 = vmatmul.mubr.f32.gmra.mrb[0].mxu0 %v737
      %v865 = vpop.f32.mrb[0].mxu0
      %v866 = vadd.f32 %v698, %v865
      %v867 = vpop.f32.mrb[0].mxu0
      %868 = vdwg.mxu0
      %v869 = vsel %vm304, %v806, -inf
      %870 = vmax.xlane.f32.xlu0 %v869
      %v871 = vpop.xlane.xlu0 %870
      %v872 = vsel %vm304, %v811, -inf
      %873 = vmax.xlane.f32.xlu0 %v872
      %v874 = vpop.xlane.xlu0 %873
      %v875 = vsel %vm304, %v816, -inf
      %876 = vmax.xlane.f32.xlu0 %v875
      %v877 = vpop.xlane.xlu0 %876
      %v878 = vsel %vm304, %v821, -inf
      %879 = vmax.xlane.f32.xlu0 %v878
      %v880 = vpop.xlane.xlu0 %879
      %v881 = vsel %vm304, %v826, -inf
      %882 = vmax.xlane.f32.xlu0 %v881
      %v883 = vpop.xlane.xlu0 %882
      %v884 = vsel %vm304, %v831, -inf
      %885 = vmax.xlane.f32.xlu0 %v884
      %v886 = vpop.xlane.xlu0 %885
      %v887 = vsel %vm304, %v836, -inf
      %888 = vmax.xlane.f32.xlu0 %v887
      %v889 = vpop.xlane.xlu0 %888
      %v890 = vsel %vm304, %v841, -inf
      %891 = vmax.xlane.f32.xlu0 %v890
      %v892 = vpop.xlane.xlu0 %891
      %v893 = vsel %vm304, %v846, -inf
      %894 = vmax.xlane.f32.xlu0 %v893
      %v895 = vpop.xlane.xlu0 %894
      %v896 = vsel %vm304, %v851, -inf
      %897 = vmax.xlane.f32.xlu0 %v896
      %v898 = vpop.xlane.xlu0 %897
      %v899 = vsel %vm304, %v856, -inf
      %900 = vmax.xlane.f32.xlu0 %v899
      %v901 = vpop.xlane.xlu0 %900
      %v902 = vsel %vm304, %v861, -inf
      %903 = vmax.xlane.f32.xlu0 %v902
      %v904 = vpop.xlane.xlu0 %903
      %v905 = vsel %vm304, %v866, -inf
      %906 = vmax.xlane.f32.xlu0 %v905
      %v907 = vpop.xlane.xlu0 %906
      %v908 = vsub.f32 %v806, %v871
      %v909 = vsub.f32 %v811, %v874
      %v910 = vsub.f32 %v816, %v877
      %v911 = vsub.f32 %v821, %v880
      %v912 = vsub.f32 %v826, %v883
      %v913 = vsub.f32 %v831, %v886
      %v914 = vsub.f32 %v836, %v889
      %v915 = vsub.f32 %v841, %v892
      %v916 = vsub.f32 %v846, %v895
      %v917 = vsub.f32 %v851, %v898
      %v918 = vsub.f32 %v856, %v901
      %v919 = vsub.f32 %v861, %v904
      %v920 = vsub.f32 %v866, %v907
      %v921 = vmul.f32 %v908, 1.442695
      %v922 = vpow.pop %v921
      %v923 = vmul.f32 %v909, 1.442695
      %v924 = vpow.pop %v923
      %v925 = vmul.f32 %v910, 1.442695
      %v926 = vpow.pop %v925
      %v927 = vmul.f32 %v911, 1.442695
      %v928 = vpow.pop %v927
      %v929 = vmul.f32 %v912, 1.442695
      %v930 = vpow.pop %v929
      %v931 = vmul.f32 %v913, 1.442695
      %v932 = vpow.pop %v931
      %v933 = vmul.f32 %v914, 1.442695
      %v934 = vpow.pop %v933
      %v935 = vmul.f32 %v915, 1.442695
      %v936 = vpow.pop %v935
      %v937 = vmul.f32 %v916, 1.442695
      %v938 = vpow.pop %v937
      %v939 = vmul.f32 %v917, 1.442695
      %v940 = vpow.pop %v939
      %v941 = vmul.f32 %v918, 1.442695
      %v942 = vpow.pop %v941
      %v943 = vmul.f32 %v919, 1.442695
      %v944 = vpow.pop %v943
      %v945 = vmul.f32 %v920, 1.442695
      %v946 = vpow.pop %v945
      %v947 = vsel %vm304, %v922, 0.0
      %948 = vadd.xlane.f32.xlu0 %v947
      %v949 = vpop.xlane.xlu0 %948
      %v950 = vsel %vm304, %v924, 0.0
      %951 = vadd.xlane.f32.xlu0 %v950
      %v952 = vpop.xlane.xlu0 %951
      %v953 = vsel %vm304, %v926, 0.0
      %954 = vadd.xlane.f32.xlu0 %v953
      %v955 = vpop.xlane.xlu0 %954
      %v956 = vsel %vm304, %v928, 0.0
      %957 = vadd.xlane.f32.xlu0 %v956
      %v958 = vpop.xlane.xlu0 %957
      %v959 = vsel %vm304, %v930, 0.0
      %960 = vadd.xlane.f32.xlu0 %v959
      %v961 = vpop.xlane.xlu0 %960
      %v962 = vsel %vm304, %v932, 0.0
      %963 = vadd.xlane.f32.xlu0 %v962
      %v964 = vpop.xlane.xlu0 %963
      %v965 = vsel %vm304, %v934, 0.0
      %966 = vadd.xlane.f32.xlu0 %v965
      %v967 = vpop.xlane.xlu0 %966
      %v968 = vsel %vm304, %v936, 0.0
      %969 = vadd.xlane.f32.xlu0 %v968
      %v970 = vpop.xlane.xlu0 %969
      %v971 = vsel %vm304, %v938, 0.0
      %972 = vadd.xlane.f32.xlu0 %v971
      %v973 = vpop.xlane.xlu0 %972
      %v974 = vsel %vm304, %v940, 0.0
      %975 = vadd.xlane.f32.xlu0 %v974
      %v976 = vpop.xlane.xlu0 %975
      %v977 = vsel %vm304, %v942, 0.0
      %978 = vadd.xlane.f32.xlu0 %v977
      %v979 = vpop.xlane.xlu0 %978
      %v980 = vsel %vm304, %v944, 0.0
      %981 = vadd.xlane.f32.xlu0 %v980
      %v982 = vpop.xlane.xlu0 %981
      %v983 = vsel %vm304, %v946, 0.0
      %984 = vadd.xlane.f32.xlu0 %v983
      %v985 = vpop.xlane.xlu0 %984
      %v986 = vrcp.pop %v949
      %v987 = vmul.f32 %v922, %v986
      %v988 = vrcp.pop %v952
      %v989 = vmul.f32 %v924, %v988
      %v990 = vrcp.pop %v955
      %v991 = vmul.f32 %v926, %v990
      %v992 = vrcp.pop %v958
      %v993 = vmul.f32 %v928, %v992
      %v994 = vrcp.pop %v961
      %v995 = vmul.f32 %v930, %v994
      %v996 = vrcp.pop %v964
      %v997 = vmul.f32 %v932, %v996
      %v998 = vrcp.pop %v967
      %v999 = vmul.f32 %v934, %v998
      %v1000 = vrcp.pop %v970
      %v1001 = vmul.f32 %v936, %v1000
      %v1002 = vrcp.pop %v973
      %v1003 = vmul.f32 %v938, %v1002
      %v1004 = vrcp.pop %v976
      %v1005 = vmul.f32 %v940, %v1004
      %v1006 = vrcp.pop %v979
      %v1007 = vmul.f32 %v942, %v1006
      %v1008 = vrcp.pop %v982
      %v1009 = vmul.f32 %v944, %v1008
      %v1010 = vrcp.pop %v985
      %v1011 = vmul.f32 %v946, %v1010
      %1012 = vst.msk [vmem:[%s280] sm:$0xff] %vm304, %v987
      %1013 = vst.msk [vmem:[%s280 + $0x8] sm:$0xff] %vm304, %v989
      %1014 = vst.msk [vmem:[%s280 + $0x10] sm:$0xff] %vm304, %v991
      %1015 = vst.msk [vmem:[%s280 + $0x18] sm:$0xff] %vm304, %v993
      %1016 = vst.msk [vmem:[%s280 + $0x20] sm:$0xff] %vm304, %v995
      %1017 = vst.msk [vmem:[%s280 + $0x28] sm:$0xff] %vm304, %v997
      %1018 = vst.msk [vmem:[%s280 + $0x30] sm:$0xff] %vm304, %v999
      %1019 = vst.msk [vmem:[%s280 + $0x38] sm:$0xff] %vm304, %v1001
      %1020 = vst.msk [vmem:[%s280 + $0x40] sm:$0xff] %vm304, %v1003
      %1021 = vst.msk [vmem:[%s280 + $0x48] sm:$0xff] %vm304, %v1005
      %1022 = vst.msk [vmem:[%s280 + $0x50] sm:$0xff] %vm304, %v1007
      %1023 = vst.msk [vmem:[%s280 + $0x58] sm:$0xff] %vm304, %v1009
      %1024 = vst.msk [vmem:[%s280 + $0x60] sm:$0xff] %vm304, %v1011
      %s1025 = smul.u32 13, %s18
      %p1026 = scmp.lt.s32.totalorder %s1025, 25
      %s1027 = scalar_select %p1026, %s1025, 25
      %s1028 = smul.addr %s1027, 8
      %s1029 = scalar_lea.vmem %s7, %s1028
      // Predicated region
      $region49: #{tpu_custom_call.1} parent=47 // pred_check
        %p1030 = pneg %p188
      $region50: #{tpu_custom_call.1} parent=47 // pred_check_branch
        %1032 = sbr.rel (%p1030) target = $region52
      $region51: #{tpu_custom_call.1} parent=47 // pred_region
        %s1033 = smul.u32 13, %s18
      $region52: #{tpu_custom_call.1} parent=47 // pred_fallthru
        _
    $region48: #{tpu_custom_call.1} parent=5 // pred_fallthru
      _
    %p1034 = scmp.le.s32.totalorder 2, %s13
    // Predicated region
    $region53: #{tpu_custom_call.1} parent=5 // pred_check
      %p1035 = pneg %p1034
    $region54: #{tpu_custom_call.1} parent=5 // pred_check_branch
      %1037 = sbr.rel (%p1035) target = $region56
    $region55: #{tpu_custom_call.1} parent=5 // pred_region
      %s1038 = ssub.s32 %s13, 2
      // Predicated region
      $region57: #{tpu_custom_call.1} parent=55 // pred_check
        %p1039 = pneg %p194
      $region58: #{tpu_custom_call.1} parent=55 // pred_check_branch
        %1041 = sbr.rel (%p1039) target = $region60
      $region59: #{tpu_custom_call.1} parent=55 // pred_region
        %s1042 = smul.u32 13, %s19
        %p1043 = scmp.lt.s32.totalorder %s1042, 25
        %s1044 = scalar_select %p1043, %s1042, 25
        %s1045 = smul.addr %s1044, 8
        %s1046 = scalar_lea.vmem %s7, %s1045
      $region60: #{tpu_custom_call.1} parent=55 // pred_fallthru
        _
    $region56: #{tpu_custom_call.1} parent=5 // pred_fallthru
      _
  $region6: #{tpu_custom_call.1} parent=0 // loop_footer
    %s17 = sadd.s32 1, %s13
  $region7: #{tpu_custom_call.1} parent=0 // loop_footer_branch
    %12 = sbr.rel target = $region3
  $region8: #{tpu_custom_call.1} parent=0 // loop_exit
    _

</llo_original>
